<compile_context>
chip_gen: v7x
topology: tpu7x:2x2x1
jax: 0.10.0
libtpu: 0.0.40
codegen_flags: <defaults>
</compile_context>

<pallas_src>
import functools

import jax
import jax.numpy as jnp
from jax import lax
from jax.experimental import pallas as pl
from jax.experimental.pallas import tpu as pltpu


def _round_up(x, m):
    return (x + m - 1) // m * m


# ----------------------------- Pallas kernels -----------------------------

def _max4_kernel(a_ref, b_ref, c_ref, d_ref, o_ref):
    # 2x2 max pool == elementwise max of the four shifted views.
    o_ref[...] = jnp.maximum(jnp.maximum(a_ref[...], b_ref[...]),
                             jnp.maximum(c_ref[...], d_ref[...]))


def _conv_mm_stats_kernel(a_ref, w_ref, b_ref, o_ref, s1_ref, s2_ref, acc_ref):
    # Tiled (TM, TK) @ (TK, Coutp) on the MXU, bf16 in / f32 accumulate.
    # Epilogue: add bias and emit per-tile per-channel sum / sum-of-squares
    # (pre-bias) so BatchNorm batch statistics never require a second pass.
    k = pl.program_id(1)

    @pl.when(k == 0)
    def _init():
        acc_ref[...] = jnp.zeros_like(acc_ref)

    acc_ref[...] += jnp.dot(a_ref[...], w_ref[...],
                            preferred_element_type=jnp.float32)

    @pl.when(k == pl.num_programs(1) - 1)
    def _finalize():
        acc = acc_ref[...]
        o_ref[...] = acc + b_ref[...]
        s1_ref[...] = jnp.sum(acc, axis=0, keepdims=True)
        s2_ref[...] = jnp.sum(acc * acc, axis=0, keepdims=True)


def _bn_relu_kernel(x_ref, scale_ref, shift_ref, o_ref):
    # y = x * scale + shift (folded BatchNorm), then ReLU.  Channels on lanes.
    y = x_ref[...] * scale_ref[...] + shift_ref[...]
    o_ref[...] = jnp.maximum(y, 0.0)


# ------------------------------ layer wrappers ------------------------------

def maxpool2x2(x):
    """x: (N, H, W, C) float32 -> (N, H//2, W//2, C), MaxPool2d(2) semantics."""
    n, h, w, c = x.shape
    oh, ow = h // 2, w // 2
    views = [x[:, dh::2, dw::2, :].reshape(n * oh, ow * c)
             for dh in (0, 1) for dw in (0, 1)]
    m, lanes = n * oh, ow * c
    tm = min(512, _round_up(m, 8))
    spec = pl.BlockSpec((tm, lanes), lambda i: (i, 0))
    out = pl.pallas_call(
        _max4_kernel,
        out_shape=jax.ShapeDtypeStruct((m, lanes), x.dtype),
        grid=(pl.cdiv(m, tm),),
        in_specs=[spec] * 4,
        out_specs=spec,
        compiler_params=pltpu.CompilerParams(dimension_semantics=("parallel",)),
    )(*views)
    return out.reshape(n, oh, ow, c)


def conv3x3_bn_relu(x, w, b, gamma, beta, *, eps=1e-5, tm_max=256, tk_max=512):
    """x: (N, H, W, Cin) f32; w: (Cout, Cin, 3, 3) PyTorch layout; stride 1 / pad 1.
    Returns (N, H, W, Cout) f32 after BatchNorm (batch statistics) + ReLU."""
    n, h, wdim, cin = x.shape
    cout = w.shape[0]
    assert w.shape == (cout, cin, 3, 3)

    # im2col in channels-last (kh, kw, cin) order; patches materialized in bf16
    # (half the HBM bytes), no large minor-dim transpose needed.
    xp = jnp.pad(x, ((0, 0), (1, 1), (1, 1), (0, 0))).astype(jnp.bfloat16)
    taps = [xp[:, i:i + h, j:j + wdim, :] for i in range(3) for j in range(3)]
    patches = jnp.stack(taps, axis=3)                      # (N, H, W, 9, Cin)
    m = n * h * wdim
    kdim = 9 * cin
    a = patches.reshape(m, kdim)                           # bf16

    w2d = jnp.transpose(w, (2, 3, 1, 0)).reshape(kdim, cout)   # (kh,kw,cin) x cout

    # Pad to (8,128)-aligned, MXU-friendly shapes.  Zero padding keeps both the
    # matmul and the fused batch statistics exact.
    coutp = _round_up(cout, 128)
    kp = _round_up(kdim, 128)
    tk = min(tk_max, kp)
    kp = _round_up(kp, tk)
    tm = min(tm_max, _round_up(m, 8))
    mp = _round_up(m, tm)

    a = jnp.pad(a, ((0, mp - m), (0, kp - kdim)))
    w_bf = jnp.pad(w2d, ((0, kp - kdim), (0, coutp - cout))).astype(jnp.bfloat16)
    b_row = jnp.pad(b, (0, coutp - cout)).reshape(1, coutp).astype(jnp.float32)

    nm, nk = mp // tm, kp // tk
    cost = pl.CostEstimate(
        flops=2 * mp * kp * coutp,
        transcendentals=0,
        bytes_accessed=a.size * 2 + w_bf.size * 2 + mp * coutp * 4,
    )
    conv_out, psum, psumsq = pl.pallas_call(
        _conv_mm_stats_kernel,
        out_shape=(jax.ShapeDtypeStruct((mp, coutp), jnp.float32),
                   jax.ShapeDtypeStruct((nm, coutp), jnp.float32),
                   jax.ShapeDtypeStruct((nm, coutp), jnp.float32)),
        grid=(nm, nk),
        in_specs=[pl.BlockSpec((tm, tk), lambda i, k: (i, k)),
                  pl.BlockSpec((tk, coutp), lambda i, k: (k, 0)),
                  pl.BlockSpec((1, coutp), lambda i, k: (0, 0))],
        out_specs=(pl.BlockSpec((tm, coutp), lambda i, k: (i, 0)),
                   pl.BlockSpec((1, coutp), lambda i, k: (i, 0)),
                   pl.BlockSpec((1, coutp), lambda i, k: (i, 0))),
        scratch_shapes=[pltpu.VMEM((tm, coutp), jnp.float32)],
        compiler_params=pltpu.CompilerParams(
            dimension_semantics=("parallel", "arbitrary")),
        cost_estimate=cost,
    )(a, w_bf, b_row)

    # BatchNorm2d batch statistics (biased variance over N*H*W, f32).
    # Zero-padded rows contribute 0 to the pre-bias partial sums, so dividing
    # by the real row count m is exact; adding the bias only shifts the mean.
    s1 = jnp.sum(psum, axis=0) / m
    s2 = jnp.sum(psumsq, axis=0) / m
    mean = s1 + b_row[0]
    var = jnp.maximum(s2 - s1 * s1, 0.0)
    gamma_p = jnp.pad(gamma, (0, coutp - cout), constant_values=1.0)
    beta_p = jnp.pad(beta, (0, coutp - cout))
    rstd = lax.rsqrt(var + eps)
    scale = (gamma_p * rstd).reshape(1, coutp).astype(jnp.float32)
    shift = (beta_p - mean * gamma_p * rstd).reshape(1, coutp).astype(jnp.float32)

    y = pl.pallas_call(
        _bn_relu_kernel,
        out_shape=jax.ShapeDtypeStruct((mp, coutp), jnp.float32),
        grid=(nm,),
        in_specs=[pl.BlockSpec((tm, coutp), lambda i: (i, 0)),
                  pl.BlockSpec((1, coutp), lambda i: (0, 0)),
                  pl.BlockSpec((1, coutp), lambda i: (0, 0))],
        out_specs=pl.BlockSpec((tm, coutp), lambda i: (i, 0)),
        compiler_params=pltpu.CompilerParams(dimension_semantics=("parallel",)),
    )(conv_out, scale, shift)

    return y[:m, :cout].reshape(n, h, wdim, cout)


# ------------------------------ model ------------------------------

def init_params(key, in_channels, out_channels):
    mid = out_channels  # ConvUnit default: mid_channels = out_channels
    specs = [(in_channels, mid), (mid, out_channels)]
    params = []
    for i, (cin, cout) in enumerate(specs):
        k1, k2, k3, k4 = jax.random.split(jax.random.fold_in(key, i), 4)
        fan_in = cin * 9
        w = jax.random.normal(k1, (cout, cin, 3, 3), jnp.float32) / jnp.sqrt(float(fan_in))
        b = 0.01 * jax.random.normal(k2, (cout,), jnp.float32)
        gamma = 1.0 + 0.1 * jax.random.normal(k3, (cout,), jnp.float32)
        beta = 0.1 * jax.random.normal(k4, (cout,), jnp.float32)
        params.append((w, b, gamma, beta))
    return params


def down_layer_forward(params, x_nchw):
    # NCHW -> NHWC once; everything downstream is channels-last.
    x = jnp.transpose(x_nchw, (0, 2, 3, 1))
    x = maxpool2x2(x)
    for (w, b, gamma, beta) in params:
        x = conv3x3_bn_relu(x, w, b, gamma, beta)
    return jnp.transpose(x, (0, 3, 1, 2))   # back to NCHW to match PyTorch


if __name__ == "__main__":
    key = jax.random.PRNGKey(0)
    in_channels, out_channels = 4, 8
    n, height, width = 2, 16, 16

    pkey, xkey = jax.random.split(key)
    params = init_params(pkey, in_channels, out_channels)
    x = jax.random.normal(xkey, (n, in_channels, height, width), jnp.float32)

    fwd = jax.jit(functools.partial(down_layer_forward, params))
    out = jax.block_until_ready(fwd(x))
    assert out.shape == (n, out_channels, height // 2, width // 2), out.shape
    assert bool(jnp.all(jnp.isfinite(out)))
    print("KERNEL_OK")
</pallas_src>

<mosaic_0001>
module attributes {stable_mosaic.version = 11 : i64} {
  func.func @_max4_kernel(%arg0: i32, %arg1: memref<16x32xf32, #tpu.memory_space<vmem>>, %arg2: memref<16x32xf32, #tpu.memory_space<vmem>>, %arg3: memref<16x32xf32, #tpu.memory_space<vmem>>, %arg4: memref<16x32xf32, #tpu.memory_space<vmem>>, %arg5: memref<16x32xf32, #tpu.memory_space<vmem>>) attributes {dimension_semantics = [#tpu.dimension_semantics<parallel>], iteration_bounds = array<i64: 1>, scalar_prefetch = 0 : i64, scratch_operands = 0 : i64, tpu.core_type = #tpu.core_type<tc>, window_params = [{transform_indices = @transform_0, window_bounds = array<i64: 16, 32>}, {transform_indices = @transform_1, window_bounds = array<i64: 16, 32>}, {transform_indices = @transform_2, window_bounds = array<i64: 16, 32>}, {transform_indices = @transform_3, window_bounds = array<i64: 16, 32>}, {transform_indices = @transform_4, window_bounds = array<i64: 16, 32>}]} {
    %c0 = arith.constant 0 : index
    %c0_0 = arith.constant 0 : index
    %0 = vector.load %arg1[%c0, %c0_0] : memref<16x32xf32, #tpu.memory_space<vmem>>, vector<16x32xf32>
    %c0_1 = arith.constant 0 : index
    %c0_2 = arith.constant 0 : index
    %1 = vector.load %arg2[%c0_1, %c0_2] : memref<16x32xf32, #tpu.memory_space<vmem>>, vector<16x32xf32>
    %2 = arith.maximumf %0, %1 : vector<16x32xf32>
    %c0_3 = arith.constant 0 : index
    %c0_4 = arith.constant 0 : index
    %3 = vector.load %arg3[%c0_3, %c0_4] : memref<16x32xf32, #tpu.memory_space<vmem>>, vector<16x32xf32>
    %c0_5 = arith.constant 0 : index
    %c0_6 = arith.constant 0 : index
    %4 = vector.load %arg4[%c0_5, %c0_6] : memref<16x32xf32, #tpu.memory_space<vmem>>, vector<16x32xf32>
    %5 = arith.maximumf %3, %4 : vector<16x32xf32>
    %6 = arith.maximumf %2, %5 : vector<16x32xf32>
    %c0_7 = arith.constant 0 : index
    %c0_8 = arith.constant 0 : index
    %7 = vector.load %arg5[%c0_7, %c0_8] : memref<16x32xf32, #tpu.memory_space<vmem>>, vector<16x32xf32>
    tpu.vector_store %arg5[%c0_7, %c0_8], %6 {strides = array<i32>} : memref<16x32xf32, #tpu.memory_space<vmem>>, vector<16x32xf32>,
    return
  }
  func.func @transform_0(%arg0: i32) -> (i32, i32) {
    %c0_i32 = arith.constant 0 : i32
    %c0_i32_0 = arith.constant 0 : i32
    return %arg0, %c0_i32 : i32, i32
  }
  func.func @transform_1(%arg0: i32) -> (i32, i32) {
    %c0_i32 = arith.constant 0 : i32
    %c0_i32_0 = arith.constant 0 : i32
    return %arg0, %c0_i32 : i32, i32
  }
  func.func @transform_2(%arg0: i32) -> (i32, i32) {
    %c0_i32 = arith.constant 0 : i32
    %c0_i32_0 = arith.constant 0 : i32
    return %arg0, %c0_i32 : i32, i32
  }
  func.func @transform_3(%arg0: i32) -> (i32, i32) {
    %c0_i32 = arith.constant 0 : i32
    %c0_i32_0 = arith.constant 0 : i32
    return %arg0, %c0_i32 : i32, i32
  }
  func.func @transform_4(%arg0: i32) -> (i32, i32) {
    %c0_i32 = arith.constant 0 : i32
    %c0_i32_0 = arith.constant 0 : i32
    return %arg0, %c0_i32 : i32, i32
  }
}

module attributes {stable_mosaic.version = 11 : i64} {
  func.func @_conv_mm_stats_kernel(%arg0: i32, %arg1: i32, %arg2: memref<128x128xbf16, #tpu.memory_space<vmem>>, %arg3: memref<128x128xbf16, #tpu.memory_space<vmem>>, %arg4: memref<1x128xf32, #tpu.memory_space<vmem>>, %arg5: memref<128x128xf32, #tpu.memory_space<vmem>>, %arg6: memref<1x128xf32, #tpu.memory_space<vmem>>, %arg7: memref<1x128xf32, #tpu.memory_space<vmem>>, %arg8: memref<128x128xf32, #tpu.memory_space<vmem>>) attributes {dimension_semantics = [#tpu.dimension_semantics<parallel>, #tpu.dimension_semantics<arbitrary>], iteration_bounds = array<i64: 1, 1>, scalar_prefetch = 0 : i64, scratch_operands = 1 : i64, tpu.core_type = #tpu.core_type<tc>, window_params = [{transform_indices = @transform_0, window_bounds = array<i64: 128, 128>}, {transform_indices = @transform_1, window_bounds = array<i64: 128, 128>}, {pipeline_mode = #tpu.pipeline_mode<synchronous>, transform_indices = @transform_2, window_bounds = array<i64: 1, 128>}, {transform_indices = @transform_3, window_bounds = array<i64: 128, 128>}, {transform_indices = @transform_4, window_bounds = array<i64: 1, 128>}, {transform_indices = @transform_5, window_bounds = array<i64: 1, 128>}]} {
    %c0_i32 = arith.constant 0 : i32
    %0 = arith.cmpi eq, %arg1, %c0_i32 : i32
    %1 = arith.extui %0 : i1 to i32
    %c0_i32_0 = arith.constant 0 : i32
    %2 = arith.cmpi ne, %1, %c0_i32_0 : i32
    scf.if %2 {
      %cst_10 = arith.constant 0.000000e+00 : f32
      %12 = vector.broadcast %cst_10 : f32 to vector<128x128xf32>
      %c0_11 = arith.constant 0 : index
      %c0_12 = arith.constant 0 : index
      %13 = vector.load %arg8[%c0_11, %c0_12] : memref<128x128xf32, #tpu.memory_space<vmem>>, vector<128x128xf32>
      tpu.vector_store %arg8[%c0_11, %c0_12], %12 {strides = array<i32>} : memref<128x128xf32, #tpu.memory_space<vmem>>, vector<128x128xf32>,
    } else {
    }
    %c0 = arith.constant 0 : index
    %c0_1 = arith.constant 0 : index
    %3 = vector.load %arg8[%c0, %c0_1] : memref<128x128xf32, #tpu.memory_space<vmem>>, vector<128x128xf32>
    %c0_2 = arith.constant 0 : index
    %c0_3 = arith.constant 0 : index
    %4 = vector.load %arg2[%c0_2, %c0_3] : memref<128x128xbf16, #tpu.memory_space<vmem>>, vector<128x128xbf16>
    %c0_4 = arith.constant 0 : index
    %c0_5 = arith.constant 0 : index
    %5 = vector.load %arg3[%c0_4, %c0_5] : memref<128x128xbf16, #tpu.memory_space<vmem>>, vector<128x128xbf16>
    %cst = arith.constant dense<0.000000e+00> : vector<128x128xf32>
    %6 = tpu.matmul %4, %5, %cst {dimension_numbers = #tpu.dot_dimension_numbers<[1], [0], [0], [1], [0, 0, 1, 1], [], []>} : vector<128x128xbf16>, vector<128x128xbf16>, vector<128x128xf32> -> vector<128x128xf32>
    %7 = arith.addf %3, %6 : vector<128x128xf32>
    %c0_6 = arith.constant 0 : index
    %c0_7 = arith.constant 0 : index
    %8 = vector.load %arg8[%c0_6, %c0_7] : memref<128x128xf32, #tpu.memory_space<vmem>>, vector<128x128xf32>
    tpu.vector_store %arg8[%c0_6, %c0_7], %7 {strides = array<i32>} : memref<128x128xf32, #tpu.memory_space<vmem>>, vector<128x128xf32>,
    %c0_i32_8 = arith.constant 0 : i32
    %9 = arith.cmpi eq, %arg1, %c0_i32_8 : i32
    %10 = arith.extui %9 : i1 to i32
    %c0_i32_9 = arith.constant 0 : i32
    %11 = arith.cmpi ne, %10, %c0_i32_9 : i32
    scf.if %11 {
      %c0_10 = arith.constant 0 : index
      %c0_11 = arith.constant 0 : index
      %12 = vector.load %arg8[%c0_10, %c0_11] : memref<128x128xf32, #tpu.memory_space<vmem>>, vector<128x128xf32>
      %c0_12 = arith.constant 0 : index
      %c0_13 = arith.constant 0 : index
      %13 = vector.load %arg4[%c0_12, %c0_13] : memref<1x128xf32, #tpu.memory_space<vmem>>, vector<1x128xf32>
      %14 = vector.broadcast %13 : vector<1x128xf32> to vector<128x128xf32>
      %15 = arith.addf %12, %14 : vector<128x128xf32>
      %c0_14 = arith.constant 0 : index
      %c0_15 = arith.constant 0 : index
      %16 = vector.load %arg5[%c0_14, %c0_15] : memref<128x128xf32, #tpu.memory_space<vmem>>, vector<128x128xf32>
      tpu.vector_store %arg5[%c0_14, %c0_15], %15 {strides = array<i32>} : memref<128x128xf32, #tpu.memory_space<vmem>>, vector<128x128xf32>,
      %cst_16 = arith.constant dense<0.000000e+00> : vector<128xf32>
      %17 = vector.multi_reduction <add>, %12, %cst_16 [0] : vector<128x128xf32> to vector<128xf32>
      %18 = vector.shape_cast %17 : vector<128xf32> to vector<1x128xf32>
      %c0_17 = arith.constant 0 : index
      %c0_18 = arith.constant 0 : index
      %19 = vector.load %arg6[%c0_17, %c0_18] : memref<1x128xf32, #tpu.memory_space<vmem>>, vector<1x128xf32>
      tpu.vector_store %arg6[%c0_17, %c0_18], %18 {strides = array<i32>} : memref<1x128xf32, #tpu.memory_space<vmem>>, vector<1x128xf32>,
      %20 = arith.mulf %12, %12 : vector<128x128xf32>
      %cst_19 = arith.constant dense<0.000000e+00> : vector<128xf32>
      %21 = vector.multi_reduction <add>, %20, %cst_19 [0] : vector<128x128xf32> to vector<128xf32>
      %22 = vector.shape_cast %21 : vector<128xf32> to vector<1x128xf32>
      %c0_20 = arith.constant 0 : index
      %c0_21 = arith.constant 0 : index
      %23 = vector.load %arg7[%c0_20, %c0_21] : memref<1x128xf32, #tpu.memory_space<vmem>>, vector<1x128xf32>
      tpu.vector_store %arg7[%c0_20, %c0_21], %22 {strides = array<i32>} : memref<1x128xf32, #tpu.memory_space<vmem>>, vector<1x128xf32>,
    } else {
    }
    return
  }
  func.func @transform_0(%arg0: i32, %arg1: i32) -> (i32, i32) {
    %c0_i32 = arith.constant 0 : i32
    return %arg0, %arg1 : i32, i32
  }
  func.func @transform_1(%arg0: i32, %arg1: i32) -> (i32, i32) {
    %c0_i32 = arith.constant 0 : i32
    %c0_i32_0 = arith.constant 0 : i32
    return %arg1, %c0_i32 : i32, i32
  }
  func.func @transform_2(%arg0: i32, %arg1: i32) -> (i32, i32) {
    %c0_i32 = arith.constant 0 : i32
    %c0_i32_0 = arith.constant 0 : i32
    %c0_i32_1 = arith.constant 0 : i32
    return %c0_i32, %c0_i32_0 : i32, i32
  }
  func.func @transform_3(%arg0: i32, %arg1: i32) -> (i32, i32) {
    %c0_i32 = arith.constant 0 : i32
    %c0_i32_0 = arith.constant 0 : i32
    return %arg0, %c0_i32 : i32, i32
  }
  func.func @transform_4(%arg0: i32, %arg1: i32) -> (i32, i32) {
    %c0_i32 = arith.constant 0 : i32
    %c0_i32_0 = arith.constant 0 : i32
    return %arg0, %c0_i32 : i32, i32
  }
  func.func @transform_5(%arg0: i32, %arg1: i32) -> (i32, i32) {
    %c0_i32 = arith.constant 0 : i32
    %c0_i32_0 = arith.constant 0 : i32
    return %arg0, %c0_i32 : i32, i32
  }
}

module attributes {stable_mosaic.version = 11 : i64} {
  func.func @_bn_relu_kernel(%arg0: i32, %arg1: memref<128x128xf32, #tpu.memory_space<vmem>>, %arg2: memref<1x128xf32, #tpu.memory_space<vmem>>, %arg3: memref<1x128xf32, #tpu.memory_space<vmem>>, %arg4: memref<128x128xf32, #tpu.memory_space<vmem>>) attributes {dimension_semantics = [#tpu.dimension_semantics<parallel>], iteration_bounds = array<i64: 1>, scalar_prefetch = 0 : i64, scratch_operands = 0 : i64, tpu.core_type = #tpu.core_type<tc>, window_params = [{transform_indices = @transform_0, window_bounds = array<i64: 128, 128>}, {pipeline_mode = #tpu.pipeline_mode<synchronous>, transform_indices = @transform_1, window_bounds = array<i64: 1, 128>}, {pipeline_mode = #tpu.pipeline_mode<synchronous>, transform_indices = @transform_2, window_bounds = array<i64: 1, 128>}, {transform_indices = @transform_3, window_bounds = array<i64: 128, 128>}]} {
    %c0 = arith.constant 0 : index
    %c0_0 = arith.constant 0 : index
    %0 = vector.load %arg1[%c0, %c0_0] : memref<128x128xf32, #tpu.memory_space<vmem>>, vector<128x128xf32>
    %c0_1 = arith.constant 0 : index
    %c0_2 = arith.constant 0 : index
    %1 = vector.load %arg2[%c0_1, %c0_2] : memref<1x128xf32, #tpu.memory_space<vmem>>, vector<1x128xf32>
    %2 = vector.broadcast %1 : vector<1x128xf32> to vector<128x128xf32>
    %3 = arith.mulf %0, %2 : vector<128x128xf32>
    %c0_3 = arith.constant 0 : index
    %c0_4 = arith.constant 0 : index
    %4 = vector.load %arg3[%c0_3, %c0_4] : memref<1x128xf32, #tpu.memory_space<vmem>>, vector<1x128xf32>
    %5 = vector.broadcast %4 : vector<1x128xf32> to vector<128x128xf32>
    %6 = arith.addf %3, %5 : vector<128x128xf32>
    %cst = arith.constant 0.000000e+00 : f32
    %7 = vector.broadcast %cst : f32 to vector<128x128xf32>
    %8 = arith.maximumf %6, %7 : vector<128x128xf32>
    %c0_5 = arith.constant 0 : index
    %c0_6 = arith.constant 0 : index
    %9 = vector.load %arg4[%c0_5, %c0_6] : memref<128x128xf32, #tpu.memory_space<vmem>>, vector<128x128xf32>
    tpu.vector_store %arg4[%c0_5, %c0_6], %8 {strides = array<i32>} : memref<128x128xf32, #tpu.memory_space<vmem>>, vector<128x128xf32>,
    return
  }
  func.func @transform_0(%arg0: i32) -> (i32, i32) {
    %c0_i32 = arith.constant 0 : i32
    %c0_i32_0 = arith.constant 0 : i32
    return %arg0, %c0_i32 : i32, i32
  }
  func.func @transform_1(%arg0: i32) -> (i32, i32) {
    %c0_i32 = arith.constant 0 : i32
    %c0_i32_0 = arith.constant 0 : i32
    %c0_i32_1 = arith.constant 0 : i32
    return %c0_i32, %c0_i32_0 : i32, i32
  }
  func.func @transform_2(%arg0: i32) -> (i32, i32) {
    %c0_i32 = arith.constant 0 : i32
    %c0_i32_0 = arith.constant 0 : i32
    %c0_i32_1 = arith.constant 0 : i32
    return %c0_i32, %c0_i32_0 : i32, i32
  }
  func.func @transform_3(%arg0: i32) -> (i32, i32) {
    %c0_i32 = arith.constant 0 : i32
    %c0_i32_0 = arith.constant 0 : i32
    return %arg0, %c0_i32 : i32, i32
  }
}

</mosaic_0001>

<llo_original>
// kernel: down_layer_forward.5
$region0: #{down_layer_forward.5}
  #allocation0 [shape = 'u32[]', space=smem, size = 0x4, offset = 0x4, fixed_abs, tag = 'smem constant byte address 0x4 - core index']
  #allocation1 [shape = 'u32[144,128]{1,0:T(1,128)}', space=vmem, size = 0x12000, scoped, tag = 'internal scratch']
  %s0 = inlined_call_operand.vmem [shape: f32[16,32], index: 0, kind: input, shape index: {}]
  %s1 = inlined_call_operand.vmem [shape: f32[16,32], index: 1, kind: input, shape index: {}]
  %s2 = inlined_call_operand.vmem [shape: f32[16,32], index: 2, kind: input, shape index: {}]
  %s3 = inlined_call_operand.vmem [shape: f32[16,32], index: 3, kind: input, shape index: {}]
  %s4 = inlined_call_operand.vmem [shape: f32[16,32], index: 4, kind: output, shape index: {}]
  %s5 = sld [smem:[#allocation0]]
  $region26: #{down_layer_forward.5} parent=0
    _
  %s7 = ssub.s32 1, %s5
  %s8 = scalar_select 0, %s7, %s5
  // Predicated region
  $region2: #{down_layer_forward.5} parent=0 // pred_check
    _
  $region3: #{down_layer_forward.5} parent=0 // pred_check_branch
    %10 = sbr.rel (0) target = $region5
  $region4: #{down_layer_forward.5} parent=0 // pred_region
    _
  $region5: #{down_layer_forward.5} parent=0 // pred_fallthru
    _
  // Predicated region
  $region6: #{down_layer_forward.5} parent=0 // pred_check
    _
  $region7: #{down_layer_forward.5} parent=0 // pred_check_branch
    %12 = sbr.rel (0) target = $region9
  $region8: #{down_layer_forward.5} parent=0 // pred_region
    _
  $region9: #{down_layer_forward.5} parent=0 // pred_fallthru
    _
  // Predicated region
  $region10: #{down_layer_forward.5} parent=0 // pred_check
    _
  $region11: #{down_layer_forward.5} parent=0 // pred_check_branch
    %14 = sbr.rel (0) target = $region13
  $region12: #{down_layer_forward.5} parent=0 // pred_region
    _
  $region13: #{down_layer_forward.5} parent=0 // pred_fallthru
    _
  // Predicated region
  $region14: #{down_layer_forward.5} parent=0 // pred_check
    _
  $region15: #{down_layer_forward.5} parent=0 // pred_check_branch
    %16 = sbr.rel (0) target = $region17
  $region16: #{down_layer_forward.5} parent=0 // pred_region
    _
  $region17: #{down_layer_forward.5} parent=0 // pred_fallthru
    _
  %v17 = vld [vmem:[%s0] sm:$0xff]
  %v18 = vld [vmem:[%s0 + $0x8] sm:$0xff]
  %v19 = vld [vmem:[%s1] sm:$0xff]
  %v20 = vld [vmem:[%s1 + $0x8] sm:$0xff]
  %v21 = vmax.f32 %v17, %v19
  %v22 = vmax.f32 %v18, %v20
  %v23 = vld [vmem:[%s2] sm:$0xff]
  %v24 = vld [vmem:[%s2 + $0x8] sm:$0xff]
  %v25 = vld [vmem:[%s3] sm:$0xff]
  %v26 = vld [vmem:[%s3 + $0x8] sm:$0xff]
  %v27 = vmax.f32 %v23, %v25
  %v28 = vmax.f32 %v24, %v26
  %v29 = vmax.f32 %v21, %v27
  %v30 = vmax.f32 %v22, %v28
  %vm31 = vcmask 261120
  %32 = vst.msk [vmem:[%s4] sm:$0xff] %vm31, %v29
  %33 = vst.msk [vmem:[%s4 + $0x8] sm:$0xff] %vm31, %v30
  // Predicated region
  $region18: #{down_layer_forward.5} parent=0 // pred_check
    _
  $region19: #{down_layer_forward.5} parent=0 // pred_check_branch
    %35 = sbr.rel (0) target = $region21
  $region20: #{down_layer_forward.5} parent=0 // pred_region
    _
  $region21: #{down_layer_forward.5} parent=0 // pred_fallthru
    _
  // Predicated region
  $region22: #{down_layer_forward.5} parent=0 // pred_check
    _
  $region23: #{down_layer_forward.5} parent=0 // pred_check_branch
    %37 = sbr.rel (0) target = $region25
  $region24: #{down_layer_forward.5} parent=0 // pred_region
    _
  $region25: #{down_layer_forward.5} parent=0 // pred_fallthru
    _

// kernel: mul.1
$region0: #{mul.1}
  #allocation0 [shape = 's32[1]{0}', space=sflag, size = 0x4, scoped, tag = 'scoped memory for mul.1']
  %s0 = inlined_call_operand.vmem [shape: f32[1,128], index: 0, kind: input, shape index: {}]
  %s1 = inlined_call_operand.vmem [shape: f32[1,128], index: 1, kind: input, shape index: {}]
  %s2 = inlined_call_operand.vmem [shape: f32[1,128], index: 2, kind: output, shape index: {}]
  %v3 = vld [vmem:[%s0] sm:$0x1]
  %v4 = vld [vmem:[%s1] sm:$0x1]
  %5 = xla_tuple %v3, %v4
  %6 = xla_tuple %5
  %v7 = vmul.f32 %v3, %v4
  %8 = xla_tuple %v7
  %9 = vst [vmem:[%s2] sm:$0x1] %v7

// kernel: down_layer_forward.6
$region0: #{down_layer_forward.6}
  #allocation0 [shape = 'u32[]', space=smem, size = 0x4, offset = 0x4, fixed_abs, tag = 'smem constant byte address 0x4 - core index']
  #allocation1 [shape = 'u32[144,128]{1,0:T(1,128)}', space=vmem, size = 0x12000, scoped, tag = 'internal scratch']
  #allocation2 [shape = 'f32[128,128]{1,0:T(8,128)}', space=vmem, size = 0x10000, scoped, tag = 'scratch operand']
  %s0 = inlined_call_operand.vmem [shape: bf16[128,128], index: 0, kind: input, shape index: {}]
  %s1 = inlined_call_operand.vmem [shape: bf16[128,128], index: 1, kind: input, shape index: {}]
  %s2 = inlined_call_operand.vmem [shape: f32[1,128], index: 2, kind: input, shape index: {}]
  %s3 = inlined_call_operand.vmem [shape: f32[128,128], index: 3, kind: output, shape index: {0}]
  %s4 = inlined_call_operand.vmem [shape: f32[1,128], index: 4, kind: output, shape index: {1}]
  %s5 = inlined_call_operand.vmem [shape: f32[1,128], index: 5, kind: output, shape index: {2}]
  %6 = xla_tuple %s3, %s4, %s5
  %s7 = sld [smem:[#allocation0]]
  $region46: #{down_layer_forward.6} parent=0
    _
  %s9 = ssub.s32 1, %s7
  %s10 = scalar_select 0, %s9, %s7
  // Predicated region
  $region2: #{down_layer_forward.6} parent=0 // pred_check
    _
  $region3: #{down_layer_forward.6} parent=0 // pred_check_branch
    %12 = sbr.rel (0) target = $region5
  $region4: #{down_layer_forward.6} parent=0 // pred_region
    _
  $region5: #{down_layer_forward.6} parent=0 // pred_fallthru
    _
  // Predicated region
  $region6: #{down_layer_forward.6} parent=0 // pred_check
    _
  $region7: #{down_layer_forward.6} parent=0 // pred_check_branch
    %14 = sbr.rel (0) target = $region9
  $region8: #{down_layer_forward.6} parent=0 // pred_region
    _
  $region9: #{down_layer_forward.6} parent=0 // pred_fallthru
    _
  // Predicated region
  $region10: #{down_layer_forward.6} parent=0 // pred_check
    _
  $region11: #{down_layer_forward.6} parent=0 // pred_check_branch
    %16 = sbr.rel (0) target = $region13
  $region12: #{down_layer_forward.6} parent=0 // pred_region
    _
  $region13: #{down_layer_forward.6} parent=0 // pred_fallthru
    _
  %p18 = scmp.eq.s32.totalorder 0, 0
  // Predicated region
  $region14: #{down_layer_forward.6} parent=0 // pred_check
    %p19 = pneg %p18
  $region15: #{down_layer_forward.6} parent=0 // pred_check_branch
    %21 = sbr.rel (%p19) target = $region17
  $region16: #{down_layer_forward.6} parent=0 // pred_region
    %22 = vst [vmem:[#allocation2] sm:$0xff] 0.0
    %23 = vst [vmem:[#allocation2 + $0x8] sm:$0xff] 0.0
    %24 = vst [vmem:[#allocation2 + $0x10] sm:$0xff] 0.0
    %25 = vst [vmem:[#allocation2 + $0x18] sm:$0xff] 0.0
    %26 = vst [vmem:[#allocation2 + $0x20] sm:$0xff] 0.0
    %27 = vst [vmem:[#allocation2 + $0x28] sm:$0xff] 0.0
    %28 = vst [vmem:[#allocation2 + $0x30] sm:$0xff] 0.0
    %29 = vst [vmem:[#allocation2 + $0x38] sm:$0xff] 0.0
    %30 = vst [vmem:[#allocation2 + $0x40] sm:$0xff] 0.0
    %31 = vst [vmem:[#allocation2 + $0x48] sm:$0xff] 0.0
    %32 = vst [vmem:[#allocation2 + $0x50] sm:$0xff] 0.0
    %33 = vst [vmem:[#allocation2 + $0x58] sm:$0xff] 0.0
    %34 = vst [vmem:[#allocation2 + $0x60] sm:$0xff] 0.0
    %35 = vst [vmem:[#allocation2 + $0x68] sm:$0xff] 0.0
    %36 = vst [vmem:[#allocation2 + $0x70] sm:$0xff] 0.0
    %37 = vst [vmem:[#allocation2 + $0x78] sm:$0xff] 0.0
  $region17: #{down_layer_forward.6} parent=0 // pred_fallthru
    _
  %v38 = vld [vmem:[#allocation2] sm:$0xff]
  %v39 = vld [vmem:[#allocation2 + $0x8] sm:$0xff]
  %v40 = vld [vmem:[#allocation2 + $0x10] sm:$0xff]
  %v41 = vld [vmem:[#allocation2 + $0x18] sm:$0xff]
  %v42 = vld [vmem:[#allocation2 + $0x20] sm:$0xff]
  %v43 = vld [vmem:[#allocation2 + $0x28] sm:$0xff]
  %v44 = vld [vmem:[#allocation2 + $0x30] sm:$0xff]
  %v45 = vld [vmem:[#allocation2 + $0x38] sm:$0xff]
  %v46 = vld [vmem:[#allocation2 + $0x40] sm:$0xff]
  %v47 = vld [vmem:[#allocation2 + $0x48] sm:$0xff]
  %v48 = vld [vmem:[#allocation2 + $0x50] sm:$0xff]
  %v49 = vld [vmem:[#allocation2 + $0x58] sm:$0xff]
  %v50 = vld [vmem:[#allocation2 + $0x60] sm:$0xff]
  %v51 = vld [vmem:[#allocation2 + $0x68] sm:$0xff]
  %v52 = vld [vmem:[#allocation2 + $0x70] sm:$0xff]
  %v53 = vld [vmem:[#allocation2 + $0x78] sm:$0xff]
  %v54 = vld [vmem:[%s0] sm:$0xf]
  %v55 = vld [vmem:[%s0 + $0x4] sm:$0xf]
  %v56 = vld [vmem:[%s0 + $0x8] sm:$0xf]
  %v57 = vld [vmem:[%s0 + $0xc] sm:$0xf]
  %v58 = vld [vmem:[%s0 + $0x10] sm:$0xf]
  %v59 = vld [vmem:[%s0 + $0x14] sm:$0xf]
  %v60 = vld [vmem:[%s0 + $0x18] sm:$0xf]
  %v61 = vld [vmem:[%s0 + $0x1c] sm:$0xf]
  %v62 = vld [vmem:[%s0 + $0x20] sm:$0xf]
  %v63 = vld [vmem:[%s0 + $0x24] sm:$0xf]
  %v64 = vld [vmem:[%s0 + $0x28] sm:$0xf]
  %v65 = vld [vmem:[%s0 + $0x2c] sm:$0xf]
  %v66 = vld [vmem:[%s0 + $0x30] sm:$0xf]
  %v67 = vld [vmem:[%s0 + $0x34] sm:$0xf]
  %v68 = vld [vmem:[%s0 + $0x38] sm:$0xf]
  %v69 = vld [vmem:[%s0 + $0x3c] sm:$0xf]
  %v70 = vld [vmem:[%s1] sm:$0xf]
  %v71 = vld [vmem:[%s1 + $0x4] sm:$0xf]
  %v72 = vld [vmem:[%s1 + $0x8] sm:$0xf]
  %v73 = vld [vmem:[%s1 + $0xc] sm:$0xf]
  %v74 = vld [vmem:[%s1 + $0x10] sm:$0xf]
  %v75 = vld [vmem:[%s1 + $0x14] sm:$0xf]
  %v76 = vld [vmem:[%s1 + $0x18] sm:$0xf]
  %v77 = vld [vmem:[%s1 + $0x1c] sm:$0xf]
  %v78 = vld [vmem:[%s1 + $0x20] sm:$0xf]
  %v79 = vld [vmem:[%s1 + $0x24] sm:$0xf]
  %v80 = vld [vmem:[%s1 + $0x28] sm:$0xf]
  %v81 = vld [vmem:[%s1 + $0x2c] sm:$0xf]
  %v82 = vld [vmem:[%s1 + $0x30] sm:$0xf]
  %v83 = vld [vmem:[%s1 + $0x34] sm:$0xf]
  %v84 = vld [vmem:[%s1 + $0x38] sm:$0xf]
  %v85 = vld [vmem:[%s1 + $0x3c] sm:$0xf]
  %v102 = vunpack.c.l.b16 %v54
  %v103 = vunpack.c.l.b16 %v55
  %v104 = vunpack.c.l.b16 %v56
  %v105 = vunpack.c.l.b16 %v57
  %v106 = vunpack.c.l.b16 %v58
  %v107 = vunpack.c.l.b16 %v59
  %v108 = vunpack.c.l.b16 %v60
  %v109 = vunpack.c.l.b16 %v61
  %v110 = vunpack.c.l.b16 %v62
  %v111 = vunpack.c.l.b16 %v63
  %v112 = vunpack.c.l.b16 %v64
  %v113 = vunpack.c.l.b16 %v65
  %v114 = vunpack.c.l.b16 %v66
  %v115 = vunpack.c.l.b16 %v67
  %v116 = vunpack.c.l.b16 %v68
  %v117 = vunpack.c.l.b16 %v69
  %v118 = vpack.c.b16 %v103, %v102
  %v119 = vpack.c.b16 %v105, %v104
  %v120 = vpack.c.b16 %v107, %v106
  %v121 = vpack.c.b16 %v109, %v108
  %v122 = vpack.c.b16 %v111, %v110
  %v123 = vpack.c.b16 %v113, %v112
  %v124 = vpack.c.b16 %v115, %v114
  %v125 = vpack.c.b16 %v117, %v116
  %v150 = vunpack.c.l.b16 %v70
  %v151 = vunpack.c.l.b16 %v71
  %v152 = vunpack.c.l.b16 %v72
  %v153 = vunpack.c.l.b16 %v73
  %v154 = vunpack.c.l.b16 %v74
  %v155 = vunpack.c.l.b16 %v75
  %v156 = vunpack.c.l.b16 %v76
  %v157 = vunpack.c.l.b16 %v77
  %v158 = vunpack.c.l.b16 %v78
  %v159 = vunpack.c.l.b16 %v79
  %v160 = vunpack.c.l.b16 %v80
  %v161 = vunpack.c.l.b16 %v81
  %v162 = vunpack.c.l.b16 %v82
  %v163 = vunpack.c.l.b16 %v83
  %v164 = vunpack.c.l.b16 %v84
  %v165 = vunpack.c.l.b16 %v85
  %v166 = vpack.c.b16 %v151, %v150
  %v167 = vpack.c.b16 %v153, %v152
  %v168 = vpack.c.b16 %v155, %v154
  %v169 = vpack.c.b16 %v157, %v156
  %v170 = vpack.c.b16 %v159, %v158
  %v171 = vpack.c.b16 %v161, %v160
  %v172 = vpack.c.b16 %v163, %v162
  %v173 = vpack.c.b16 %v165, %v164
  %182 = vmatprep.subr.bf16.mxu0 0
  %183 = vmatpush1.bf16.msra.mxu0 %v166
  %184 = vmatprep.subr.bf16.mxu0 0
  %185 = vmatpush1.bf16.msra.mxu0 %v167
  %186 = vmatprep.subr.bf16.mxu0 0
  %187 = vmatpush1.bf16.msra.mxu0 %v168
  %188 = vmatprep.subr.bf16.mxu0 0
  %189 = vmatpush1.bf16.msra.mxu0 %v169
  %190 = vmatprep.subr.bf16.mxu0 0
  %191 = vmatpush1.bf16.msra.mxu0 %v170
  %192 = vmatprep.subr.bf16.mxu0 0
  %193 = vmatpush1.bf16.msra.mxu0 %v171
  %194 = vmatprep.subr.bf16.mxu0 0
  %195 = vmatpush1.bf16.msra.mxu0 %v172
  %196 = vmatprep.subr.bf16.mxu0 0
  %197 = vmatpush1.bf16.msra.mxu0 %v173
  %198 = vmatprep.subr.bf16.mxu0 0
  %199 = vmatpush1.bf16.msra.mxu0 0
  %200 = vmatprep.subr.bf16.mxu0 0
  %201 = vmatpush1.bf16.msra.mxu0 0
  %202 = vmatprep.subr.bf16.mxu0 0
  %203 = vmatpush1.bf16.msra.mxu0 0
  %204 = vmatprep.subr.bf16.mxu0 0
  %205 = vmatpush1.bf16.msra.mxu0 0
  %206 = vmatprep.subr.bf16.mxu0 0
  %207 = vmatpush1.bf16.msra.mxu0 0
  %208 = vmatprep.subr.bf16.mxu0 0
  %209 = vmatpush1.bf16.msra.mxu0 0
  %210 = vmatprep.subr.bf16.mxu0 0
  %211 = vmatpush1.bf16.msra.mxu0 0
  %212 = vmatprep.subr.bf16.mxu0 0
  %213 = vmatpush1.bf16.msra.mxu0 0
  %214 = vmatprep.mubr.bf16.mxu0 0
  %215 = vmatmul.mubr.bf16.gmra.mrb[0].mxu0 %v118
  %v216 = vpop.f32.mrb[0].mxu0
  %v217 = vadd.f32 0.0, %v216
  %v218 = vpop.f32.mrb[0].mxu0
  %v219 = vpop.f32.mrb[0].mxu0
  %v220 = vadd.f32 0.0, %v219
  %v221 = vpop.f32.mrb[0].mxu0
  %222 = vmatprep.mubr.bf16.mxu0 0
  %223 = vmatmul.mubr.bf16.gmra.mrb[0].mxu0 %v119
  %v224 = vpop.f32.mrb[0].mxu0
  %v225 = vadd.f32 0.0, %v224
  %v226 = vpop.f32.mrb[0].mxu0
  %v227 = vpop.f32.mrb[0].mxu0
  %v228 = vadd.f32 0.0, %v227
  %v229 = vpop.f32.mrb[0].mxu0
  %230 = vmatprep.mubr.bf16.mxu0 0
  %231 = vmatmul.mubr.bf16.gmra.mrb[0].mxu0 %v120
  %v232 = vpop.f32.mrb[0].mxu0
  %v233 = vadd.f32 0.0, %v232
  %v234 = vpop.f32.mrb[0].mxu0
  %v235 = vpop.f32.mrb[0].mxu0
  %v236 = vadd.f32 0.0, %v235
  %v237 = vpop.f32.mrb[0].mxu0
  %238 = vmatprep.mubr.bf16.mxu0 0
  %239 = vmatmul.mubr.bf16.gmra.mrb[0].mxu0 %v121
  %v240 = vpop.f32.mrb[0].mxu0
  %v241 = vadd.f32 0.0, %v240
  %v242 = vpop.f32.mrb[0].mxu0
  %v243 = vpop.f32.mrb[0].mxu0
  %v244 = vadd.f32 0.0, %v243
  %v245 = vpop.f32.mrb[0].mxu0
  %246 = vmatprep.mubr.bf16.mxu0 0
  %247 = vmatmul.mubr.bf16.gmra.mrb[0].mxu0 %v122
  %v248 = vpop.f32.mrb[0].mxu0
  %v249 = vadd.f32 0.0, %v248
  %v250 = vpop.f32.mrb[0].mxu0
  %v251 = vpop.f32.mrb[0].mxu0
  %v252 = vadd.f32 0.0, %v251
  %v253 = vpop.f32.mrb[0].mxu0
  %254 = vmatprep.mubr.bf16.mxu0 0
  %255 = vmatmul.mubr.bf16.gmra.mrb[0].mxu0 %v123
  %v256 = vpop.f32.mrb[0].mxu0
  %v257 = vadd.f32 0.0, %v256
  %v258 = vpop.f32.mrb[0].mxu0
  %v259 = vpop.f32.mrb[0].mxu0
  %v260 = vadd.f32 0.0, %v259
  %v261 = vpop.f32.mrb[0].mxu0
  %262 = vmatprep.mubr.bf16.mxu0 0
  %263 = vmatmul.mubr.bf16.gmra.mrb[0].mxu0 %v124
  %v264 = vpop.f32.mrb[0].mxu0
  %v265 = vadd.f32 0.0, %v264
  %v266 = vpop.f32.mrb[0].mxu0
  %v267 = vpop.f32.mrb[0].mxu0
  %v268 = vadd.f32 0.0, %v267
  %v269 = vpop.f32.mrb[0].mxu0
  %270 = vmatprep.mubr.bf16.mxu0 0
  %271 = vmatmul.mubr.bf16.gmra.mrb[0].mxu0 %v125
  %v272 = vpop.f32.mrb[0].mxu0
  %v273 = vadd.f32 0.0, %v272
  %v274 = vpop.f32.mrb[0].mxu0
  %v275 = vpop.f32.mrb[0].mxu0
  %v276 = vadd.f32 0.0, %v275
  %v277 = vpop.f32.mrb[0].mxu0
  %278 = vdwg.mxu0
  %v279 = vadd.f32 %v38, %v217
  %v280 = vadd.f32 %v39, %v220
  %v281 = vadd.f32 %v40, %v225
  %v282 = vadd.f32 %v41, %v228
  %v283 = vadd.f32 %v42, %v233
  %v284 = vadd.f32 %v43, %v236
  %v285 = vadd.f32 %v44, %v241
  %v286 = vadd.f32 %v45, %v244
  %v287 = vadd.f32 %v46, %v249
  %v288 = vadd.f32 %v47, %v252
  %v289 = vadd.f32 %v48, %v257
  %v290 = vadd.f32 %v49, %v260
  %v291 = vadd.f32 %v50, %v265
  %v292 = vadd.f32 %v51, %v268
  %v293 = vadd.f32 %v52, %v273
  %v294 = vadd.f32 %v53, %v276
  %295 = vst [vmem:[#allocation2] sm:$0xff] %v279
  %296 = vst [vmem:[#allocation2 + $0x8] sm:$0xff] %v280
  %297 = vst [vmem:[#allocation2 + $0x10] sm:$0xff] %v281
  %298 = vst [vmem:[#allocation2 + $0x18] sm:$0xff] %v282
  %299 = vst [vmem:[#allocation2 + $0x20] sm:$0xff] %v283
  %300 = vst [vmem:[#allocation2 + $0x28] sm:$0xff] %v284
  %301 = vst [vmem:[#allocation2 + $0x30] sm:$0xff] %v285
  %302 = vst [vmem:[#allocation2 + $0x38] sm:$0xff] %v286
  %303 = vst [vmem:[#allocation2 + $0x40] sm:$0xff] %v287
  %304 = vst [vmem:[#allocation2 + $0x48] sm:$0xff] %v288
  %305 = vst [vmem:[#allocation2 + $0x50] sm:$0xff] %v289
  %306 = vst [vmem:[#allocation2 + $0x58] sm:$0xff] %v290
  %307 = vst [vmem:[#allocation2 + $0x60] sm:$0xff] %v291
  %308 = vst [vmem:[#allocation2 + $0x68] sm:$0xff] %v292
  %309 = vst [vmem:[#allocation2 + $0x70] sm:$0xff] %v293
  %310 = vst [vmem:[#allocation2 + $0x78] sm:$0xff] %v294
  // Predicated region
  $region18: #{down_layer_forward.6} parent=0 // pred_check
    %p311 = pneg %p18
  $region19: #{down_layer_forward.6} parent=0 // pred_check_branch
    %313 = sbr.rel (%p311) target = $region21
  $region20: #{down_layer_forward.6} parent=0 // pred_region
    %v314 = vld [vmem:[#allocation2] sm:$0xff]
    %v315 = vld [vmem:[#allocation2 + $0x8] sm:$0xff]
    %v316 = vld [vmem:[#allocation2 + $0x10] sm:$0xff]
    %v317 = vld [vmem:[#allocation2 + $0x18] sm:$0xff]
    %v318 = vld [vmem:[#allocation2 + $0x20] sm:$0xff]
    %v319 = vld [vmem:[#allocation2 + $0x28] sm:$0xff]
    %v320 = vld [vmem:[#allocation2 + $0x30] sm:$0xff]
    %v321 = vld [vmem:[#allocation2 + $0x38] sm:$0xff]
    %v322 = vld [vmem:[#allocation2 + $0x40] sm:$0xff]
    %v323 = vld [vmem:[#allocation2 + $0x48] sm:$0xff]
    %v324 = vld [vmem:[#allocation2 + $0x50] sm:$0xff]
    %v325 = vld [vmem:[#allocation2 + $0x58] sm:$0xff]
    %v326 = vld [vmem:[#allocation2 + $0x60] sm:$0xff]
    %v327 = vld [vmem:[#allocation2 + $0x68] sm:$0xff]
    %v328 = vld [vmem:[#allocation2 + $0x70] sm:$0xff]
    %v329 = vld [vmem:[#allocation2 + $0x78] sm:$0xff]
    %v330 = vld [vmem:[%s2] sm:$0x1]
    %v332 = vlaneseq
    %v333 = vshrl.u32 %v332, 7
    %v334 = vsub.s32 0, %v333
    %v335 = vrot.slane %v330, %v334
    %v337 = vadd.f32 %v314, %v335
    %v338 = vadd.f32 %v315, %v335
    %v339 = vadd.f32 %v316, %v335
    %v340 = vadd.f32 %v317, %v335
    %v341 = vadd.f32 %v318, %v335
    %v342 = vadd.f32 %v319, %v335
    %v343 = vadd.f32 %v320, %v335
    %v344 = vadd.f32 %v321, %v335
    %v345 = vadd.f32 %v322, %v335
    %v346 = vadd.f32 %v323, %v335
    %v347 = vadd.f32 %v324, %v335
    %v348 = vadd.f32 %v325, %v335
    %v349 = vadd.f32 %v326, %v335
    %v350 = vadd.f32 %v327, %v335
    %v351 = vadd.f32 %v328, %v335
    %v352 = vadd.f32 %v329, %v335
    %353 = vst [vmem:[%s3] sm:$0xff] %v337
    %354 = vst [vmem:[%s3 + $0x8] sm:$0xff] %v338
    %355 = vst [vmem:[%s3 + $0x10] sm:$0xff] %v339
    %356 = vst [vmem:[%s3 + $0x18] sm:$0xff] %v340
    %357 = vst [vmem:[%s3 + $0x20] sm:$0xff] %v341
    %358 = vst [vmem:[%s3 + $0x28] sm:$0xff] %v342
    %359 = vst [vmem:[%s3 + $0x30] sm:$0xff] %v343
    %360 = vst [vmem:[%s3 + $0x38] sm:$0xff] %v344
    %361 = vst [vmem:[%s3 + $0x40] sm:$0xff] %v345
    %362 = vst [vmem:[%s3 + $0x48] sm:$0xff] %v346
    %363 = vst [vmem:[%s3 + $0x50] sm:$0xff] %v347
    %364 = vst [vmem:[%s3 + $0x58] sm:$0xff] %v348
    %365 = vst [vmem:[%s3 + $0x60] sm:$0xff] %v349
    %366 = vst [vmem:[%s3 + $0x68] sm:$0xff] %v350
    %367 = vst [vmem:[%s3 + $0x70] sm:$0xff] %v351
    %368 = vst [vmem:[%s3 + $0x78] sm:$0xff] %v352
    %v369 = vadd.f32 %v314, %v315
    %v370 = vadd.f32 %v369, %v316
    %v371 = vadd.f32 %v370, %v317
    %v372 = vadd.f32 %v371, %v318
    %v373 = vadd.f32 %v372, %v319
    %v374 = vadd.f32 %v373, %v320
    %v375 = vadd.f32 %v374, %v321
    %v376 = vadd.f32 %v375, %v322
    %v377 = vadd.f32 %v376, %v323
    %v378 = vadd.f32 %v377, %v324
    %v379 = vadd.f32 %v378, %v325
    %v380 = vadd.f32 %v379, %v326
    %v381 = vadd.f32 %v380, %v327
    %v382 = vadd.f32 %v381, %v328
    %v383 = vadd.f32 %v382, %v329
    %v384 = vrot.slane %v383, 4
    %v385 = vadd.f32 %v383, %v384
    %v386 = vrot.slane %v385, 2
    %v387 = vadd.f32 %v385, %v386
    %v388 = vrot.slane %v387, 1
    %v389 = vadd.f32 %v387, %v388
    %390 = vst [vmem:[%s4] sm:$0x1] %v389
    %v391 = vmul.f32 %v314, %v314
    %v392 = vmul.f32 %v315, %v315
    %v393 = vmul.f32 %v316, %v316
    %v394 = vmul.f32 %v317, %v317
    %v395 = vmul.f32 %v318, %v318
    %v396 = vmul.f32 %v319, %v319
    %v397 = vmul.f32 %v320, %v320
    %v398 = vmul.f32 %v321, %v321
    %v399 = vmul.f32 %v322, %v322
    %v400 = vmul.f32 %v323, %v323
    %v401 = vmul.f32 %v324, %v324
    %v402 = vmul.f32 %v325, %v325
    %v403 = vmul.f32 %v326, %v326
    %v404 = vmul.f32 %v327, %v327
    %v405 = vmul.f32 %v328, %v328
    %v406 = vmul.f32 %v329, %v329
    %v407 = vadd.f32 %v391, %v392
    %v408 = vadd.f32 %v407, %v393
    %v409 = vadd.f32 %v408, %v394
    %v410 = vadd.f32 %v409, %v395
    %v411 = vadd.f32 %v410, %v396
    %v412 = vadd.f32 %v411, %v397
    %v413 = vadd.f32 %v412, %v398
    %v414 = vadd.f32 %v413, %v399
    %v415 = vadd.f32 %v414, %v400
    %v416 = vadd.f32 %v415, %v401
    %v417 = vadd.f32 %v416, %v402
    %v418 = vadd.f32 %v417, %v403
    %v419 = vadd.f32 %v418, %v404
    %v420 = vadd.f32 %v419, %v405
    %v421 = vadd.f32 %v420, %v406
    %v422 = vrot.slane %v421, 4
    %v423 = vadd.f32 %v421, %v422
    %v424 = vrot.slane %v423, 2
    %v425 = vadd.f32 %v423, %v424
    %v426 = vrot.slane %v425, 1
    %v427 = vadd.f32 %v425, %v426
    %428 = vst [vmem:[%s5] sm:$0x1] %v427
  $region21: #{down_layer_forward.6} parent=0 // pred_fallthru
    _
  // Predicated region
  $region22: #{down_layer_forward.6} parent=0 // pred_check
    _
  $region23: #{down_layer_forward.6} parent=0 // pred_check_branch
    %430 = sbr.rel (0) target = $region25
  $region24: #{down_layer_forward.6} parent=0 // pred_region
    _
  $region25: #{down_layer_forward.6} parent=0 // pred_fallthru
    _
  // Predicated region
  $region26: #{down_layer_forward.6} parent=0 // pred_check
    _
  $region27: #{down_layer_forward.6} parent=0 // pred_check_branch
    %432 = sbr.rel (0) target = $region29
  $region28: #{down_layer_forward.6} parent=0 // pred_region
    _
  $region29: #{down_layer_forward.6} parent=0 // pred_fallthru
    _
  // Predicated region
  $region30: #{down_layer_forward.6} parent=0 // pred_check
    _
  $region31: #{down_layer_forward.6} parent=0 // pred_check_branch
    %434 = sbr.rel (0) target = $region33
  $region32: #{down_layer_forward.6} parent=0 // pred_region
    _
  $region33: #{down_layer_forward.6} parent=0 // pred_fallthru
    _
  // Predicated region
  $region34: #{down_layer_forward.6} parent=0 // pred_check
    _
  $region35: #{down_layer_forward.6} parent=0 // pred_check_branch
    %436 = sbr.rel (0) target = $region37
  $region36: #{down_layer_forward.6} parent=0 // pred_region
    _
  $region37: #{down_layer_forward.6} parent=0 // pred_fallthru
    _
  // Predicated region
  $region38: #{down_layer_forward.6} parent=0 // pred_check
    _
  $region39: #{down_layer_forward.6} parent=0 // pred_check_branch
    %438 = sbr.rel (0) target = $region41
  $region40: #{down_layer_forward.6} parent=0 // pred_region
    _
  $region41: #{down_layer_forward.6} parent=0 // pred_fallthru
    _
  // Predicated region
  $region42: #{down_layer_forward.6} parent=0 // pred_check
    _
  $region43: #{down_layer_forward.6} parent=0 // pred_check_branch
    %440 = sbr.rel (0) target = $region45
  $region44: #{down_layer_forward.6} parent=0 // pred_region
    _
  $region45: #{down_layer_forward.6} parent=0 // pred_fallthru
    _

// kernel: down_layer_forward.7
$region0: #{down_layer_forward.7}
  #allocation0 [shape = 'u32[]', space=smem, size = 0x4, offset = 0x4, fixed_abs, tag = 'smem constant byte address 0x4 - core index']
  #allocation1 [shape = 'u32[144,128]{1,0:T(1,128)}', space=vmem, size = 0x12000, scoped, tag = 'internal scratch']
  %s0 = inlined_call_operand.vmem [shape: f32[128,128], index: 0, kind: input, shape index: {}]
  %s1 = inlined_call_operand.vmem [shape: f32[1,128], index: 1, kind: input, shape index: {}]
  %s2 = inlined_call_operand.vmem [shape: f32[1,128], index: 2, kind: input, shape index: {}]
  %s3 = inlined_call_operand.vmem [shape: f32[128,128], index: 3, kind: output, shape index: {}]
  %s4 = sld [smem:[#allocation0]]
  $region22: #{down_layer_forward.7} parent=0
    _
  %s6 = ssub.s32 1, %s4
  %s7 = scalar_select 0, %s6, %s4
  // Predicated region
  $region2: #{down_layer_forward.7} parent=0 // pred_check
    _
  $region3: #{down_layer_forward.7} parent=0 // pred_check_branch
    %9 = sbr.rel (0) target = $region5
  $region4: #{down_layer_forward.7} parent=0 // pred_region
    _
  $region5: #{down_layer_forward.7} parent=0 // pred_fallthru
    _
  // Predicated region
  $region6: #{down_layer_forward.7} parent=0 // pred_check
    _
  $region7: #{down_layer_forward.7} parent=0 // pred_check_branch
    %11 = sbr.rel (0) target = $region9
  $region8: #{down_layer_forward.7} parent=0 // pred_region
    _
  $region9: #{down_layer_forward.7} parent=0 // pred_fallthru
    _
  // Predicated region
  $region10: #{down_layer_forward.7} parent=0 // pred_check
    _
  $region11: #{down_layer_forward.7} parent=0 // pred_check_branch
    %13 = sbr.rel (0) target = $region13
  $region12: #{down_layer_forward.7} parent=0 // pred_region
    _
  $region13: #{down_layer_forward.7} parent=0 // pred_fallthru
    _
  %v14 = vld [vmem:[%s0] sm:$0xff]
  %v15 = vld [vmem:[%s0 + $0x8] sm:$0xff]
  %v16 = vld [vmem:[%s0 + $0x10] sm:$0xff]
  %v17 = vld [vmem:[%s0 + $0x18] sm:$0xff]
  %v18 = vld [vmem:[%s0 + $0x20] sm:$0xff]
  %v19 = vld [vmem:[%s0 + $0x28] sm:$0xff]
  %v20 = vld [vmem:[%s0 + $0x30] sm:$0xff]
  %v21 = vld [vmem:[%s0 + $0x38] sm:$0xff]
  %v22 = vld [vmem:[%s0 + $0x40] sm:$0xff]
  %v23 = vld [vmem:[%s0 + $0x48] sm:$0xff]
  %v24 = vld [vmem:[%s0 + $0x50] sm:$0xff]
  %v25 = vld [vmem:[%s0 + $0x58] sm:$0xff]
  %v26 = vld [vmem:[%s0 + $0x60] sm:$0xff]
  %v27 = vld [vmem:[%s0 + $0x68] sm:$0xff]
  %v28 = vld [vmem:[%s0 + $0x70] sm:$0xff]
  %v29 = vld [vmem:[%s0 + $0x78] sm:$0xff]
  %v30 = vld [vmem:[%s1] sm:$0x1]
  %v32 = vlaneseq
  %v33 = vshrl.u32 %v32, 7
  %v34 = vsub.s32 0, %v33
  %v35 = vrot.slane %v30, %v34
  %v37 = vmul.f32 %v14, %v35
  %v38 = vmul.f32 %v15, %v35
  %v39 = vmul.f32 %v16, %v35
  %v40 = vmul.f32 %v17, %v35
  %v41 = vmul.f32 %v18, %v35
  %v42 = vmul.f32 %v19, %v35
  %v43 = vmul.f32 %v20, %v35
  %v44 = vmul.f32 %v21, %v35
  %v45 = vmul.f32 %v22, %v35
  %v46 = vmul.f32 %v23, %v35
  %v47 = vmul.f32 %v24, %v35
  %v48 = vmul.f32 %v25, %v35
  %v49 = vmul.f32 %v26, %v35
  %v50 = vmul.f32 %v27, %v35
  %v51 = vmul.f32 %v28, %v35
  %v52 = vmul.f32 %v29, %v35
  %v53 = vld [vmem:[%s2] sm:$0x1]
  %v55 = vlaneseq
  %v56 = vshrl.u32 %v55, 7
  %v57 = vsub.s32 0, %v56
  %v58 = vrot.slane %v53, %v57
  %v60 = vadd.f32 %v37, %v58
  %v61 = vadd.f32 %v38, %v58
  %v62 = vadd.f32 %v39, %v58
  %v63 = vadd.f32 %v40, %v58
  %v64 = vadd.f32 %v41, %v58
  %v65 = vadd.f32 %v42, %v58
  %v66 = vadd.f32 %v43, %v58
  %v67 = vadd.f32 %v44, %v58
  %v68 = vadd.f32 %v45, %v58
  %v69 = vadd.f32 %v46, %v58
  %v70 = vadd.f32 %v47, %v58
  %v71 = vadd.f32 %v48, %v58
  %v72 = vadd.f32 %v49, %v58
  %v73 = vadd.f32 %v50, %v58
  %v74 = vadd.f32 %v51, %v58
  %v75 = vadd.f32 %v52, %v58
  %v76 = vmax.f32 %v60, 0.0
  %v77 = vmax.f32 %v61, 0.0
  %v78 = vmax.f32 %v62, 0.0
  %v79 = vmax.f32 %v63, 0.0
  %v80 = vmax.f32 %v64, 0.0
  %v81 = vmax.f32 %v65, 0.0
  %v82 = vmax.f32 %v66, 0.0
  %v83 = vmax.f32 %v67, 0.0
  %v84 = vmax.f32 %v68, 0.0
  %v85 = vmax.f32 %v69, 0.0
  %v86 = vmax.f32 %v70, 0.0
  %v87 = vmax.f32 %v71, 0.0
  %v88 = vmax.f32 %v72, 0.0
  %v89 = vmax.f32 %v73, 0.0
  %v90 = vmax.f32 %v74, 0.0
  %v91 = vmax.f32 %v75, 0.0
  %92 = vst [vmem:[%s3] sm:$0xff] %v76
  %93 = vst [vmem:[%s3 + $0x8] sm:$0xff] %v77
  %94 = vst [vmem:[%s3 + $0x10] sm:$0xff] %v78
  %95 = vst [vmem:[%s3 + $0x18] sm:$0xff] %v79
  %96 = vst [vmem:[%s3 + $0x20] sm:$0xff] %v80
  %97 = vst [vmem:[%s3 + $0x28] sm:$0xff] %v81
  %98 = vst [vmem:[%s3 + $0x30] sm:$0xff] %v82
  %99 = vst [vmem:[%s3 + $0x38] sm:$0xff] %v83
  %100 = vst [vmem:[%s3 + $0x40] sm:$0xff] %v84
  %101 = vst [vmem:[%s3 + $0x48] sm:$0xff] %v85
  %102 = vst [vmem:[%s3 + $0x50] sm:$0xff] %v86
  %103 = vst [vmem:[%s3 + $0x58] sm:$0xff] %v87
  %104 = vst [vmem:[%s3 + $0x60] sm:$0xff] %v88
  %105 = vst [vmem:[%s3 + $0x68] sm:$0xff] %v89
  %106 = vst [vmem:[%s3 + $0x70] sm:$0xff] %v90
  %107 = vst [vmem:[%s3 + $0x78] sm:$0xff] %v91
  // Predicated region
  $region14: #{down_layer_forward.7} parent=0 // pred_check
    _
  $region15: #{down_layer_forward.7} parent=0 // pred_check_branch
    %109 = sbr.rel (0) target = $region17
  $region16: #{down_layer_forward.7} parent=0 // pred_region
    _
  $region17: #{down_layer_forward.7} parent=0 // pred_fallthru
    _
  // Predicated region
  $region18: #{down_layer_forward.7} parent=0 // pred_check
    _
  $region19: #{down_layer_forward.7} parent=0 // pred_check_branch
    %111 = sbr.rel (0) target = $region21
  $region20: #{down_layer_forward.7} parent=0 // pred_region
    _
  $region21: #{down_layer_forward.7} parent=0 // pred_fallthru
    _

</llo_original>
